<compile_context>
chip_gen: v7x
topology: tpu7x:2x2x1
jax: 0.10.0
libtpu: 0.0.40
codegen_flags: <defaults>
</compile_context>

<pallas_src>
import jax
import jax.numpy as jnp
from jax.experimental import pallas as pl
from jax.experimental.pallas import tpu as pltpu


def aff_kernel(x_ref, r_ref,
               w1l_ref, b1l_ref, w2l_ref, b2l_ref,
               w1g_ref, b1g_ref, w2g_ref, b2g_ref,
               o_ref):
    # x_ref / r_ref / o_ref blocks: (BB, C, HW) bf16.  Local conv weights are
    # bf16 (MXU operands); biases and global-branch weights are f32.
    w1l = w1l_ref[...]            # (Cr, C)  bf16
    b1l = b1l_ref[...]            # (Cr, 1)  f32
    w2l = w2l_ref[...]            # (C, Cr)  bf16
    b2l = b2l_ref[...]            # (C, 1)   f32
    w1g = w1g_ref[...]            # (C, Cr)  f32
    b1g = b1g_ref[...]            # (1, Cr)  f32
    w2g = w2g_ref[...]            # (C, Cr)  f32
    b2g = b2g_ref[...]            # (C, 1)   f32

    bb = x_ref.shape[0]
    for b in range(bb):           # static unroll; bb is 1 (grid over B) or B (collapsed)
        x = x_ref[b]              # (C, HW) bf16
        res = r_ref[b]            # (C, HW) bf16
        xa = x + res              # bf16 MXU / mean operand (dies after its two uses)

        # ---- local attention branch: 1x1 conv -> BN -> ReLU -> 1x1 conv -> BN ----
        # bf16 x bf16 MXU passes, f32 accumulation; HW stays lane-dense.
        h1 = jnp.dot(w1l, xa, preferred_element_type=jnp.float32) + b1l      # (Cr, HW) f32
        h1 = jnp.maximum(h1, 0.0).astype(jnp.bfloat16)                       # (Cr, HW) bf16

        # ---- global attention branch: avgpool(1) -> conv -> BN -> ReLU -> conv -> BN ----
        # M=1 mat-vecs on VPU/XLU (broadcast-multiply + reduce); mean kept in f32.
        xg_col = jnp.mean(xa.astype(jnp.float32), axis=1, keepdims=True)     # (C, 1)  f32
        g1 = jnp.sum(w1g * xg_col, axis=0, keepdims=True) + b1g              # (1, Cr) f32
        g1 = jnp.maximum(g1, 0.0)
        xg = jnp.sum(w2g * g1, axis=1, keepdims=True) + b2g                  # (C, 1)  f32

        # Fold the global column into the second bias: a single lane-broadcast.
        z = jnp.dot(w2l, h1, preferred_element_type=jnp.float32) + (b2l + xg)  # (C, HW) f32

        # ---- fuse: 2*x*sig(z) + 2*res*(1-sig(z)) == (x+res) + (x-res)*tanh(z/2) ----
        t = jnp.tanh(0.5 * z)                                                 # one EUP op/elem
        xf = x.astype(jnp.float32)
        rf = res.astype(jnp.float32)
        o_ref[b] = ((xf + rf) + (xf - rf) * t).astype(o_ref.dtype)


def fold_bn(w, b, gamma, beta, mean, var, eps=1e-5):
    """Fold eval-mode BatchNorm into a 1x1 conv expressed as a (Cin, Cout) matmul."""
    scale = gamma / jnp.sqrt(var + eps)          # (Cout,)
    w_f = w * scale[None, :]                     # (Cin, Cout)
    b_f = (b - mean) * scale + beta              # (Cout,)
    return w_f, b_f


def aff_forward(x_nchw, res_nchw, params, *, grid_over_batch=False):
    B, C, H, W = x_nchw.shape
    HW = H * W
    (w1l, b1l, w2l, b2l, w1g, b1g, w2g, b2g) = params
    Cr = w1l.shape[0]   # local first conv is (Cout=Cr, Cin=C)

    # Channel-major, no transpose: (B, C, H, W) -> (B, C, HW); bf16 at the boundary.
    x = x_nchw.reshape(B, C, HW).astype(jnp.bfloat16)
    res = res_nchw.reshape(B, C, HW).astype(jnp.bfloat16)

    # Default: single grid step (saves ~0.35us/step on 1-TC v5e/v6e at small B).
    # grid_over_batch=True keeps a "parallel" B axis for v7x's two TensorCores.
    bb = 1 if grid_over_batch else B
    grid = (B // bb,)

    pix_spec = pl.BlockSpec((bb, C, HW), lambda i: (i, 0, 0))

    def full_spec(shape):
        nd = len(shape)
        return pl.BlockSpec(shape, lambda i: (0,) * nd)

    # Advisory cost estimate (kernel is tiny relative to surrounding XLA ops).
    itemsize = 2  # bf16 I/O
    param_bytes = sum(int(p.size) * p.dtype.itemsize for p in params)
    flops = B * (2 * 2 * Cr * C * HW + 10 * C * HW + 4 * C * Cr)
    cost = pl.CostEstimate(
        flops=int(flops),
        transcendentals=int(B * C * HW),                       # one tanh per element
        bytes_accessed=int(3 * B * C * HW * itemsize + param_bytes),
    )

    out = pl.pallas_call(
        aff_kernel,
        out_shape=jax.ShapeDtypeStruct((B, C, HW), jnp.bfloat16),
        grid_spec=pltpu.PrefetchScalarGridSpec(
            num_scalar_prefetch=0,
            grid=grid,
            in_specs=[
                pix_spec, pix_spec,
                full_spec((Cr, C)), full_spec((Cr, 1)),   # local conv1 (Cout,Cin) bf16, bias (Cr,1)
                full_spec((C, Cr)), full_spec((C, 1)),    # local conv2 (Cout,Cin) bf16, bias (C,1)
                full_spec((C, Cr)), full_spec((1, Cr)),   # global conv1 (Cin,Cout) f32, bias (1,Cr)
                full_spec((C, Cr)), full_spec((C, 1)),    # global conv2 (Cout,Cin) f32, bias (C,1)
            ],
            out_specs=pix_spec,
        ),
        compiler_params=pltpu.CompilerParams(
            dimension_semantics=("parallel",) if grid_over_batch else ("arbitrary",)),
        cost_estimate=cost,
    )(x, res, w1l, b1l, w2l, b2l, w1g, b1g, w2g, b2g)

    # (B, C, HW) -> NCHW (pure reshape, no transpose); stays bf16.
    return out.reshape(B, C, H, W)


def make_params(key, channels, r):
    inter = channels // r
    keys = jax.random.split(key, 16)

    def conv_w(k, cin, cout):
        # (Cin, Cout) matmul form of a 1x1 Conv2d weight
        return jax.random.normal(k, (cin, cout), jnp.float32) * 0.1

    def vec(k, n, scale=0.1, offset=0.0):
        return jax.random.normal(k, (n,), jnp.float32) * scale + offset

    # local branch
    w1l = conv_w(keys[0], channels, inter)
    b1l = vec(keys[1], inter)
    g1l, be1l, m1l, v1l = (vec(keys[2], inter, 0.1, 1.0), vec(keys[3], inter),
                           vec(keys[4], inter), jnp.abs(vec(keys[5], inter, 0.1, 1.0)))
    w2l = conv_w(keys[6], inter, channels)
    b2l = vec(keys[7], channels)
    g2l, be2l, m2l, v2l = (vec(keys[8], channels, 0.1, 1.0), vec(keys[9], channels),
                           vec(keys[10], channels), jnp.abs(vec(keys[11], channels, 0.1, 1.0)))

    # global branch
    w1g = conv_w(keys[12], channels, inter)
    b1g = vec(keys[13], inter)
    w2g = conv_w(keys[14], inter, channels)
    b2g = vec(keys[15], channels)
    g1g = jnp.ones((inter,), jnp.float32) * 1.05
    be1g = jnp.full((inter,), 0.02, jnp.float32)
    m1g = jnp.zeros((inter,), jnp.float32)
    v1g = jnp.ones((inter,), jnp.float32)
    g2g = jnp.ones((channels,), jnp.float32) * 0.95
    be2g = jnp.full((channels,), -0.01, jnp.float32)
    m2g = jnp.zeros((channels,), jnp.float32)
    v2g = jnp.ones((channels,), jnp.float32)

    # fold eval-mode BN into convs
    w1l_f, b1l_f = fold_bn(w1l, b1l, g1l, be1l, m1l, v1l)   # (C, Cr), (Cr,)
    w2l_f, b2l_f = fold_bn(w2l, b2l, g2l, be2l, m2l, v2l)   # (Cr, C), (C,)
    w1g_f, b1g_f = fold_bn(w1g, b1g, g1g, be1g, m1g, v1g)   # (C, Cr), (Cr,)
    w2g_f, b2g_f = fold_bn(w2g, b2g, g2g, be2g, m2g, v2g)   # (Cr, C), (C,)

    return (
        # local branch: (Cout, Cin) in bf16 so the kernel runs native bf16 MXU passes
        jnp.asarray(w1l_f.T, dtype=jnp.bfloat16), b1l_f.reshape(inter, 1),
        jnp.asarray(w2l_f.T, dtype=jnp.bfloat16), b2l_f.reshape(channels, 1),
        # global branch: f32, orientations chosen so the VPU path needs no transposes
        w1g_f,                                    b1g_f.reshape(1, inter),
        jnp.asarray(w2g_f.T),                     b2g_f.reshape(channels, 1),
    )


def aff_reference(x, res, params):
    """Pure-JAX f32 reference of the same folded-BN forward (sigmoid form)."""
    (w1l_t, b1l, w2l_t, b2l, w1g, b1g, w2g_t, b2g) = params
    w1l_t = w1l_t.astype(jnp.float32)
    w2l_t = w2l_t.astype(jnp.float32)
    B, C, H, W = x.shape
    HW = H * W
    xf = x.reshape(B, C, HW)
    rf = res.reshape(B, C, HW)
    xa = xf + rf
    h1 = jnp.maximum(jnp.einsum('oc,bcp->bop', w1l_t, xa) + b1l, 0.0)      # (B, Cr, HW)
    xl = jnp.einsum('ck,bkp->bcp', w2l_t, h1) + b2l                        # (B, C, HW)
    xg_in = jnp.mean(xa, axis=2, keepdims=True)                            # (B, C, 1)
    g1 = jnp.maximum(jnp.einsum('ck,bcz->bkz', w1g, xg_in)
                     + b1g.reshape(1, -1, 1), 0.0)                         # (B, Cr, 1)
    xg = jnp.einsum('ck,bkz->bcz', w2g_t, g1) + b2g                        # (B, C, 1)
    wei = jax.nn.sigmoid(xl + xg)
    out = 2.0 * xf * wei + 2.0 * rf * (1.0 - wei)
    return out.reshape(B, C, H, W)


if __name__ == "__main__":
    B, C, H, W = 2, 64, 16, 16   # channels=64, r=4 as in the module defaults
    r = 4

    key = jax.random.PRNGKey(0)
    kx, kr, kp = jax.random.split(key, 3)
    # bf16 at the HBM boundary; reference runs in f32 with the same (bf16) weights.
    x = jax.random.normal(kx, (B, C, H, W), jnp.float32).astype(jnp.bfloat16)
    residual = jax.random.normal(kr, (B, C, H, W), jnp.float32).astype(jnp.bfloat16)
    params = make_params(kp, C, r)

    ref = aff_reference(x.astype(jnp.float32), residual.astype(jnp.float32), params)

    # Default path: single grid step (best on single-TC v5e / v6e).
    out = jax.block_until_ready(aff_forward(x, residual, params))
    assert out.shape == (B, C, H, W)
    assert out.dtype == jnp.bfloat16
    assert jnp.allclose(out.astype(jnp.float32), ref, atol=5e-2, rtol=5e-2)

    # grid-over-batch "parallel" variant (2 TensorCores on v7x).
    out_b = jax.block_until_ready(aff_forward(x, residual, params, grid_over_batch=True))
    assert jnp.allclose(out_b.astype(jnp.float32), ref, atol=5e-2, rtol=5e-2)

    print("KERNEL_OK")
</pallas_src>

<mosaic_0001>
module attributes {stable_mosaic.version = 11 : i64} {
  func.func @aff_kernel(%arg0: i32, %arg1: memref<2x64x256xbf16, #tpu.memory_space<vmem>>, %arg2: memref<2x64x256xbf16, #tpu.memory_space<vmem>>, %arg3: memref<16x64xbf16, #tpu.memory_space<vmem>>, %arg4: memref<16x1xf32, #tpu.memory_space<vmem>>, %arg5: memref<64x16xbf16, #tpu.memory_space<vmem>>, %arg6: memref<64x1xf32, #tpu.memory_space<vmem>>, %arg7: memref<64x16xf32, #tpu.memory_space<vmem>>, %arg8: memref<1x16xf32, #tpu.memory_space<vmem>>, %arg9: memref<64x16xf32, #tpu.memory_space<vmem>>, %arg10: memref<64x1xf32, #tpu.memory_space<vmem>>, %arg11: memref<2x64x256xbf16, #tpu.memory_space<vmem>>) attributes {dimension_semantics = [#tpu.dimension_semantics<arbitrary>], iteration_bounds = array<i64: 1>, scalar_prefetch = 0 : i64, scratch_operands = 0 : i64, tpu.core_type = #tpu.core_type<tc>, window_params = [{transform_indices = @transform_0, window_bounds = array<i64: 2, 64, 256>}, {transform_indices = @transform_1, window_bounds = array<i64: 2, 64, 256>}, {pipeline_mode = #tpu.pipeline_mode<synchronous>, transform_indices = @transform_2, window_bounds = array<i64: 16, 64>}, {pipeline_mode = #tpu.pipeline_mode<synchronous>, transform_indices = @transform_3, window_bounds = array<i64: 16, 1>}, {pipeline_mode = #tpu.pipeline_mode<synchronous>, transform_indices = @transform_4, window_bounds = array<i64: 64, 16>}, {pipeline_mode = #tpu.pipeline_mode<synchronous>, transform_indices = @transform_5, window_bounds = array<i64: 64, 1>}, {pipeline_mode = #tpu.pipeline_mode<synchronous>, transform_indices = @transform_6, window_bounds = array<i64: 64, 16>}, {pipeline_mode = #tpu.pipeline_mode<synchronous>, transform_indices = @transform_7, window_bounds = array<i64: 1, 16>}, {pipeline_mode = #tpu.pipeline_mode<synchronous>, transform_indices = @transform_8, window_bounds = array<i64: 64, 16>}, {pipeline_mode = #tpu.pipeline_mode<synchronous>, transform_indices = @transform_9, window_bounds = array<i64: 64, 1>}, {transform_indices = @transform_10, window_bounds = array<i64: 2, 64, 256>}]} {
    %c0 = arith.constant 0 : index
    %c0_0 = arith.constant 0 : index
    %0 = vector.load %arg3[%c0, %c0_0] : memref<16x64xbf16, #tpu.memory_space<vmem>>, vector<16x64xbf16>
    %c0_1 = arith.constant 0 : index
    %c0_2 = arith.constant 0 : index
    %1 = vector.load %arg4[%c0_1, %c0_2] : memref<16x1xf32, #tpu.memory_space<vmem>>, vector<16x1xf32>
    %c0_3 = arith.constant 0 : index
    %c0_4 = arith.constant 0 : index
    %2 = vector.load %arg5[%c0_3, %c0_4] : memref<64x16xbf16, #tpu.memory_space<vmem>>, vector<64x16xbf16>
    %c0_5 = arith.constant 0 : index
    %c0_6 = arith.constant 0 : index
    %3 = vector.load %arg6[%c0_5, %c0_6] : memref<64x1xf32, #tpu.memory_space<vmem>>, vector<64x1xf32>
    %c0_7 = arith.constant 0 : index
    %c0_8 = arith.constant 0 : index
    %4 = vector.load %arg7[%c0_7, %c0_8] : memref<64x16xf32, #tpu.memory_space<vmem>>, vector<64x16xf32>
    %c0_9 = arith.constant 0 : index
    %c0_10 = arith.constant 0 : index
    %5 = vector.load %arg8[%c0_9, %c0_10] : memref<1x16xf32, #tpu.memory_space<vmem>>, vector<1x16xf32>
    %c0_11 = arith.constant 0 : index
    %c0_12 = arith.constant 0 : index
    %6 = vector.load %arg9[%c0_11, %c0_12] : memref<64x16xf32, #tpu.memory_space<vmem>>, vector<64x16xf32>
    %c0_13 = arith.constant 0 : index
    %c0_14 = arith.constant 0 : index
    %7 = vector.load %arg10[%c0_13, %c0_14] : memref<64x1xf32, #tpu.memory_space<vmem>>, vector<64x1xf32>
    %c0_15 = arith.constant 0 : index
    %c0_16 = arith.constant 0 : index
    %c0_17 = arith.constant 0 : index
    %8 = vector.load %arg1[%c0_15, %c0_16, %c0_17] : memref<2x64x256xbf16, #tpu.memory_space<vmem>>, vector<1x64x256xbf16>
    %9 = vector.shape_cast %8 : vector<1x64x256xbf16> to vector<64x256xbf16>
    %c0_18 = arith.constant 0 : index
    %c0_19 = arith.constant 0 : index
    %c0_20 = arith.constant 0 : index
    %10 = vector.load %arg2[%c0_18, %c0_19, %c0_20] : memref<2x64x256xbf16, #tpu.memory_space<vmem>>, vector<1x64x256xbf16>
    %11 = vector.shape_cast %10 : vector<1x64x256xbf16> to vector<64x256xbf16>
    %12 = arith.addf %9, %11 : vector<64x256xbf16>
    %cst = arith.constant dense<0.000000e+00> : vector<16x256xf32>
    %13 = tpu.matmul %0, %12, %cst {dimension_numbers = #tpu.dot_dimension_numbers<[1], [0], [0], [1], [0, 0, 1, 1], [], []>} : vector<16x64xbf16>, vector<64x256xbf16>, vector<16x256xf32> -> vector<16x256xf32>
    %14 = vector.broadcast %1 : vector<16x1xf32> to vector<16x256xf32>
    %15 = arith.addf %13, %14 : vector<16x256xf32>
    %cst_21 = arith.constant 0.000000e+00 : f32
    %16 = vector.broadcast %cst_21 : f32 to vector<16x256xf32>
    %17 = arith.maximumf %15, %16 : vector<16x256xf32>
    %18 = arith.truncf %17 : vector<16x256xf32> to vector<16x256xbf16>
    %19 = arith.extf %12 : vector<64x256xbf16> to vector<64x256xf32>
    %cst_22 = arith.constant dense<0.000000e+00> : vector<64xf32>
    %20 = vector.multi_reduction <add>, %19, %cst_22 [1] : vector<64x256xf32> to vector<64xf32>
    %21 = vector.shape_cast %20 : vector<64xf32> to vector<64x1xf32>
    %cst_23 = arith.constant 2.560000e+02 : f32
    %22 = vector.broadcast %cst_23 : f32 to vector<64x1xf32>
    %23 = arith.divf %21, %22 : vector<64x1xf32>
    %24 = vector.broadcast %23 : vector<64x1xf32> to vector<64x16xf32>
    %25 = arith.mulf %4, %24 : vector<64x16xf32>
    %cst_24 = arith.constant dense<0.000000e+00> : vector<16xf32>
    %26 = vector.multi_reduction <add>, %25, %cst_24 [0] : vector<64x16xf32> to vector<16xf32>
    %27 = vector.shape_cast %26 : vector<16xf32> to vector<1x16xf32>
    %28 = arith.addf %27, %5 : vector<1x16xf32>
    %cst_25 = arith.constant 0.000000e+00 : f32
    %29 = vector.broadcast %cst_25 : f32 to vector<1x16xf32>
    %30 = arith.maximumf %28, %29 : vector<1x16xf32>
    %31 = vector.broadcast %30 : vector<1x16xf32> to vector<64x16xf32>
    %32 = arith.mulf %6, %31 : vector<64x16xf32>
    %cst_26 = arith.constant dense<0.000000e+00> : vector<64xf32>
    %33 = vector.multi_reduction <add>, %32, %cst_26 [1] : vector<64x16xf32> to vector<64xf32>
    %34 = vector.shape_cast %33 : vector<64xf32> to vector<64x1xf32>
    %35 = arith.addf %34, %7 : vector<64x1xf32>
    %cst_27 = arith.constant dense<0.000000e+00> : vector<64x256xf32>
    %36 = tpu.matmul %2, %18, %cst_27 {dimension_numbers = #tpu.dot_dimension_numbers<[1], [0], [0], [1], [0, 0, 1, 1], [], []>} : vector<64x16xbf16>, vector<16x256xbf16>, vector<64x256xf32> -> vector<64x256xf32>
    %37 = arith.addf %3, %35 : vector<64x1xf32>
    %38 = vector.broadcast %37 : vector<64x1xf32> to vector<64x256xf32>
    %39 = arith.addf %36, %38 : vector<64x256xf32>
    %cst_28 = arith.constant 5.000000e-01 : f32
    %40 = vector.broadcast %cst_28 : f32 to vector<64x256xf32>
    %41 = arith.mulf %40, %39 : vector<64x256xf32>
    %42 = math.tanh %41 : vector<64x256xf32>
    %43 = arith.extf %9 : vector<64x256xbf16> to vector<64x256xf32>
    %44 = arith.extf %11 : vector<64x256xbf16> to vector<64x256xf32>
    %45 = arith.addf %43, %44 : vector<64x256xf32>
    %46 = arith.subf %43, %44 : vector<64x256xf32>
    %47 = arith.mulf %46, %42 : vector<64x256xf32>
    %48 = arith.addf %45, %47 : vector<64x256xf32>
    %49 = arith.truncf %48 : vector<64x256xf32> to vector<64x256xbf16>
    %c0_29 = arith.constant 0 : index
    %c0_30 = arith.constant 0 : index
    %c0_31 = arith.constant 0 : index
    %50 = vector.load %arg11[%c0_29, %c0_30, %c0_31] : memref<2x64x256xbf16, #tpu.memory_space<vmem>>, vector<1x64x256xbf16>
    %51 = vector.shape_cast %50 : vector<1x64x256xbf16> to vector<64x256xbf16>
    %52 = vector.shape_cast %49 : vector<64x256xbf16> to vector<1x64x256xbf16>
    tpu.vector_store %arg11[%c0_29, %c0_30, %c0_31], %52 {strides = array<i32>} : memref<2x64x256xbf16, #tpu.memory_space<vmem>>, vector<1x64x256xbf16>,
    %c1 = arith.constant 1 : index
    %c0_32 = arith.constant 0 : index
    %c0_33 = arith.constant 0 : index
    %53 = vector.load %arg1[%c1, %c0_32, %c0_33] : memref<2x64x256xbf16, #tpu.memory_space<vmem>>, vector<1x64x256xbf16>
    %54 = vector.shape_cast %53 : vector<1x64x256xbf16> to vector<64x256xbf16>
    %c1_34 = arith.constant 1 : index
    %c0_35 = arith.constant 0 : index
    %c0_36 = arith.constant 0 : index
    %55 = vector.load %arg2[%c1_34, %c0_35, %c0_36] : memref<2x64x256xbf16, #tpu.memory_space<vmem>>, vector<1x64x256xbf16>
    %56 = vector.shape_cast %55 : vector<1x64x256xbf16> to vector<64x256xbf16>
    %57 = arith.addf %54, %56 : vector<64x256xbf16>
    %cst_37 = arith.constant dense<0.000000e+00> : vector<16x256xf32>
    %58 = tpu.matmul %0, %57, %cst_37 {dimension_numbers = #tpu.dot_dimension_numbers<[1], [0], [0], [1], [0, 0, 1, 1], [], []>} : vector<16x64xbf16>, vector<64x256xbf16>, vector<16x256xf32> -> vector<16x256xf32>
    %59 = vector.broadcast %1 : vector<16x1xf32> to vector<16x256xf32>
    %60 = arith.addf %58, %59 : vector<16x256xf32>
    %cst_38 = arith.constant 0.000000e+00 : f32
    %61 = vector.broadcast %cst_38 : f32 to vector<16x256xf32>
    %62 = arith.maximumf %60, %61 : vector<16x256xf32>
    %63 = arith.truncf %62 : vector<16x256xf32> to vector<16x256xbf16>
    %64 = arith.extf %57 : vector<64x256xbf16> to vector<64x256xf32>
    %cst_39 = arith.constant dense<0.000000e+00> : vector<64xf32>
    %65 = vector.multi_reduction <add>, %64, %cst_39 [1] : vector<64x256xf32> to vector<64xf32>
    %66 = vector.shape_cast %65 : vector<64xf32> to vector<64x1xf32>
    %cst_40 = arith.constant 2.560000e+02 : f32
    %67 = vector.broadcast %cst_40 : f32 to vector<64x1xf32>
    %68 = arith.divf %66, %67 : vector<64x1xf32>
    %69 = vector.broadcast %68 : vector<64x1xf32> to vector<64x16xf32>
    %70 = arith.mulf %4, %69 : vector<64x16xf32>
    %cst_41 = arith.constant dense<0.000000e+00> : vector<16xf32>
    %71 = vector.multi_reduction <add>, %70, %cst_41 [0] : vector<64x16xf32> to vector<16xf32>
    %72 = vector.shape_cast %71 : vector<16xf32> to vector<1x16xf32>
    %73 = arith.addf %72, %5 : vector<1x16xf32>
    %cst_42 = arith.constant 0.000000e+00 : f32
    %74 = vector.broadcast %cst_42 : f32 to vector<1x16xf32>
    %75 = arith.maximumf %73, %74 : vector<1x16xf32>
    %76 = vector.broadcast %75 : vector<1x16xf32> to vector<64x16xf32>
    %77 = arith.mulf %6, %76 : vector<64x16xf32>
    %cst_43 = arith.constant dense<0.000000e+00> : vector<64xf32>
    %78 = vector.multi_reduction <add>, %77, %cst_43 [1] : vector<64x16xf32> to vector<64xf32>
    %79 = vector.shape_cast %78 : vector<64xf32> to vector<64x1xf32>
    %80 = arith.addf %79, %7 : vector<64x1xf32>
    %cst_44 = arith.constant dense<0.000000e+00> : vector<64x256xf32>
    %81 = tpu.matmul %2, %63, %cst_44 {dimension_numbers = #tpu.dot_dimension_numbers<[1], [0], [0], [1], [0, 0, 1, 1], [], []>} : vector<64x16xbf16>, vector<16x256xbf16>, vector<64x256xf32> -> vector<64x256xf32>
    %82 = arith.addf %3, %80 : vector<64x1xf32>
    %83 = vector.broadcast %82 : vector<64x1xf32> to vector<64x256xf32>
    %84 = arith.addf %81, %83 : vector<64x256xf32>
    %cst_45 = arith.constant 5.000000e-01 : f32
    %85 = vector.broadcast %cst_45 : f32 to vector<64x256xf32>
    %86 = arith.mulf %85, %84 : vector<64x256xf32>
    %87 = math.tanh %86 : vector<64x256xf32>
    %88 = arith.extf %54 : vector<64x256xbf16> to vector<64x256xf32>
    %89 = arith.extf %56 : vector<64x256xbf16> to vector<64x256xf32>
    %90 = arith.addf %88, %89 : vector<64x256xf32>
    %91 = arith.subf %88, %89 : vector<64x256xf32>
    %92 = arith.mulf %91, %87 : vector<64x256xf32>
    %93 = arith.addf %90, %92 : vector<64x256xf32>
    %94 = arith.truncf %93 : vector<64x256xf32> to vector<64x256xbf16>
    %c1_46 = arith.constant 1 : index
    %c0_47 = arith.constant 0 : index
    %c0_48 = arith.constant 0 : index
    %95 = vector.load %arg11[%c1_46, %c0_47, %c0_48] : memref<2x64x256xbf16, #tpu.memory_space<vmem>>, vector<1x64x256xbf16>
    %96 = vector.shape_cast %95 : vector<1x64x256xbf16> to vector<64x256xbf16>
    %97 = vector.shape_cast %94 : vector<64x256xbf16> to vector<1x64x256xbf16>
    tpu.vector_store %arg11[%c1_46, %c0_47, %c0_48], %97 {strides = array<i32>} : memref<2x64x256xbf16, #tpu.memory_space<vmem>>, vector<1x64x256xbf16>,
    return
  }
  func.func @transform_0(%arg0: i32) -> (i32, i32, i32) {
    %c0_i32 = arith.constant 0 : i32
    %c0_i32_0 = arith.constant 0 : i32
    %c0_i32_1 = arith.constant 0 : i32
    return %arg0, %c0_i32, %c0_i32_0 : i32, i32, i32
  }
  func.func @transform_1(%arg0: i32) -> (i32, i32, i32) {
    %c0_i32 = arith.constant 0 : i32
    %c0_i32_0 = arith.constant 0 : i32
    %c0_i32_1 = arith.constant 0 : i32
    return %arg0, %c0_i32, %c0_i32_0 : i32, i32, i32
  }
  func.func @transform_2(%arg0: i32) -> (i32, i32) {
    %c0_i32 = arith.constant 0 : i32
    %c0_i32_0 = arith.constant 0 : i32
    %c0_i32_1 = arith.constant 0 : i32
    return %c0_i32, %c0_i32_0 : i32, i32
  }
  func.func @transform_3(%arg0: i32) -> (i32, i32) {
    %c0_i32 = arith.constant 0 : i32
    %c0_i32_0 = arith.constant 0 : i32
    %c0_i32_1 = arith.constant 0 : i32
    return %c0_i32, %c0_i32_0 : i32, i32
  }
  func.func @transform_4(%arg0: i32) -> (i32, i32) {
    %c0_i32 = arith.constant 0 : i32
    %c0_i32_0 = arith.constant 0 : i32
    %c0_i32_1 = arith.constant 0 : i32
    return %c0_i32, %c0_i32_0 : i32, i32
  }
  func.func @transform_5(%arg0: i32) -> (i32, i32) {
    %c0_i32 = arith.constant 0 : i32
    %c0_i32_0 = arith.constant 0 : i32
    %c0_i32_1 = arith.constant 0 : i32
    return %c0_i32, %c0_i32_0 : i32, i32
  }
  func.func @transform_6(%arg0: i32) -> (i32, i32) {
    %c0_i32 = arith.constant 0 : i32
    %c0_i32_0 = arith.constant 0 : i32
    %c0_i32_1 = arith.constant 0 : i32
    return %c0_i32, %c0_i32_0 : i32, i32
  }
  func.func @transform_7(%arg0: i32) -> (i32, i32) {
    %c0_i32 = arith.constant 0 : i32
    %c0_i32_0 = arith.constant 0 : i32
    %c0_i32_1 = arith.constant 0 : i32
    return %c0_i32, %c0_i32_0 : i32, i32
  }
  func.func @transform_8(%arg0: i32) -> (i32, i32) {
    %c0_i32 = arith.constant 0 : i32
    %c0_i32_0 = arith.constant 0 : i32
    %c0_i32_1 = arith.constant 0 : i32
    return %c0_i32, %c0_i32_0 : i32, i32
  }
  func.func @transform_9(%arg0: i32) -> (i32, i32) {
    %c0_i32 = arith.constant 0 : i32
    %c0_i32_0 = arith.constant 0 : i32
    %c0_i32_1 = arith.constant 0 : i32
    return %c0_i32, %c0_i32_0 : i32, i32
  }
  func.func @transform_10(%arg0: i32) -> (i32, i32, i32) {
    %c0_i32 = arith.constant 0 : i32
    %c0_i32_0 = arith.constant 0 : i32
    %c0_i32_1 = arith.constant 0 : i32
    return %arg0, %c0_i32, %c0_i32_0 : i32, i32, i32
  }
}

</mosaic_0001>

<llo_original>
// kernel: tpu_custom_call.1
$region0: #{tpu_custom_call.1}
  #allocation0 [shape = 'u32[]', space=smem, size = 0x4, offset = 0x4, fixed_abs, tag = 'smem constant byte address 0x4 - core index']
  #allocation1 [shape = 'u32[144,128]{1,0:T(1,128)}', space=vmem, size = 0x12000, scoped, tag = 'internal scratch']
  %s0 = inlined_call_operand.vmem [shape: bf16[2,64,256], index: 0, kind: input, shape index: {}]
  %s1 = inlined_call_operand.vmem [shape: bf16[2,64,256], index: 1, kind: input, shape index: {}]
  %s2 = inlined_call_operand.vmem [shape: bf16[16,64], index: 2, kind: input, shape index: {}]
  %s3 = inlined_call_operand.vmem [shape: f32[16,1], index: 3, kind: input, shape index: {}]
  %s4 = inlined_call_operand.vmem [shape: bf16[64,16], index: 4, kind: input, shape index: {}]
  %s5 = inlined_call_operand.vmem [shape: f32[64,1], index: 5, kind: input, shape index: {}]
  %s6 = inlined_call_operand.vmem [shape: f32[64,16], index: 6, kind: input, shape index: {}]
  %s7 = inlined_call_operand.vmem [shape: f32[1,16], index: 7, kind: input, shape index: {}]
  %s8 = inlined_call_operand.vmem [shape: f32[64,16], index: 8, kind: input, shape index: {}]
  %s9 = inlined_call_operand.vmem [shape: f32[64,1], index: 9, kind: input, shape index: {}]
  %s10 = inlined_call_operand.hbm [shape: bf16[2,64,256], index: 10, kind: output, shape index: {}]
  %s11 = sld [smem:[#allocation0]]
  $region50: #{tpu_custom_call.1} parent=0
    _
  %s13 = ssub.s32 1, %s11
  %s14 = scalar_select 0, %s13, %s11
  $region1: #{tpu_custom_call.1} parent=0
    #allocation2 [shape = 'u8[65536]{0}', space=vmem, size = 0x10000, scoped, tag = 'output window, operand 0, single buffered']
    #allocation3 [shape = 's32[1]{0}', space=sflag, size = 0x4, scoped, tag = 'scoped memory for tpu_custom_call.1']
    %15 = vsyncpa [#allocation3], 0
    // Predicated region
    $region2: #{tpu_custom_call.1} parent=1 // pred_check
      _
    $region3: #{tpu_custom_call.1} parent=1 // pred_check_branch
      %17 = sbr.rel (0) target = $region5
    $region4: #{tpu_custom_call.1} parent=1 // pred_region
      _
    $region5: #{tpu_custom_call.1} parent=1 // pred_fallthru
      _
    // Predicated region
    $region6: #{tpu_custom_call.1} parent=1 // pred_check
      _
    $region7: #{tpu_custom_call.1} parent=1 // pred_check_branch
      %19 = sbr.rel (0) target = $region9
    $region8: #{tpu_custom_call.1} parent=1 // pred_region
      _
    $region9: #{tpu_custom_call.1} parent=1 // pred_fallthru
      _
    // Predicated region
    $region10: #{tpu_custom_call.1} parent=1 // pred_check
      _
    $region11: #{tpu_custom_call.1} parent=1 // pred_check_branch
      %21 = sbr.rel (0) target = $region13
    $region12: #{tpu_custom_call.1} parent=1 // pred_region
      _
    $region13: #{tpu_custom_call.1} parent=1 // pred_fallthru
      _
    // Predicated region
    $region14: #{tpu_custom_call.1} parent=1 // pred_check
      _
    $region15: #{tpu_custom_call.1} parent=1 // pred_check_branch
      %23 = sbr.rel (0) target = $region17
    $region16: #{tpu_custom_call.1} parent=1 // pred_region
      _
    $region17: #{tpu_custom_call.1} parent=1 // pred_fallthru
      _
    // Predicated region
    $region18: #{tpu_custom_call.1} parent=1 // pred_check
      _
    $region19: #{tpu_custom_call.1} parent=1 // pred_check_branch
      %25 = sbr.rel (0) target = $region21
    $region20: #{tpu_custom_call.1} parent=1 // pred_region
      _
    $region21: #{tpu_custom_call.1} parent=1 // pred_fallthru
      _
    // Predicated region
    $region22: #{tpu_custom_call.1} parent=1 // pred_check
      _
    $region23: #{tpu_custom_call.1} parent=1 // pred_check_branch
      %27 = sbr.rel (0) target = $region25
    $region24: #{tpu_custom_call.1} parent=1 // pred_region
      _
    $region25: #{tpu_custom_call.1} parent=1 // pred_fallthru
      _
    // Predicated region
    $region26: #{tpu_custom_call.1} parent=1 // pred_check
      _
    $region27: #{tpu_custom_call.1} parent=1 // pred_check_branch
      %29 = sbr.rel (0) target = $region29
    $region28: #{tpu_custom_call.1} parent=1 // pred_region
      _
    $region29: #{tpu_custom_call.1} parent=1 // pred_fallthru
      _
    // Predicated region
    $region30: #{tpu_custom_call.1} parent=1 // pred_check
      _
    $region31: #{tpu_custom_call.1} parent=1 // pred_check_branch
      %31 = sbr.rel (0) target = $region33
    $region32: #{tpu_custom_call.1} parent=1 // pred_region
      _
    $region33: #{tpu_custom_call.1} parent=1 // pred_fallthru
      _
    // Predicated region
    $region34: #{tpu_custom_call.1} parent=1 // pred_check
      _
    $region35: #{tpu_custom_call.1} parent=1 // pred_check_branch
      %33 = sbr.rel (0) target = $region37
    $region36: #{tpu_custom_call.1} parent=1 // pred_region
      _
    $region37: #{tpu_custom_call.1} parent=1 // pred_fallthru
      _
    // Predicated region
    $region38: #{tpu_custom_call.1} parent=1 // pred_check
      _
    $region39: #{tpu_custom_call.1} parent=1 // pred_check_branch
      %35 = sbr.rel (0) target = $region41
    $region40: #{tpu_custom_call.1} parent=1 // pred_region
      _
    $region41: #{tpu_custom_call.1} parent=1 // pred_fallthru
      _
    %v37 = vld [vmem:[%s2] sm:$0xf]
    %v38 = vld [vmem:[%s2 + $0x4] sm:$0xf]
    %v39 = vld [vmem:[%s3] sm:$0xff]
    %v40 = vld [vmem:[%s3 + $0x8] sm:$0xff]
    %v41 = vld [vmem:[%s4] sm:$0xf]
    %v42 = vld [vmem:[%s4 + $0x4] sm:$0xf]
    %v43 = vld [vmem:[%s4 + $0x8] sm:$0xf]
    %v44 = vld [vmem:[%s4 + $0xc] sm:$0xf]
    %v45 = vld [vmem:[%s4 + $0x10] sm:$0xf]
    %v46 = vld [vmem:[%s4 + $0x14] sm:$0xf]
    %v47 = vld [vmem:[%s4 + $0x18] sm:$0xf]
    %v48 = vld [vmem:[%s4 + $0x1c] sm:$0xf]
    %v49 = vld [vmem:[%s5] sm:$0xff]
    %v50 = vld [vmem:[%s5 + $0x8] sm:$0xff]
    %v51 = vld [vmem:[%s5 + $0x10] sm:$0xff]
    %v52 = vld [vmem:[%s5 + $0x18] sm:$0xff]
    %v53 = vld [vmem:[%s5 + $0x20] sm:$0xff]
    %v54 = vld [vmem:[%s5 + $0x28] sm:$0xff]
    %v55 = vld [vmem:[%s5 + $0x30] sm:$0xff]
    %v56 = vld [vmem:[%s5 + $0x38] sm:$0xff]
    %v57 = vld [vmem:[%s6] sm:$0xff]
    %v58 = vld [vmem:[%s6 + $0x8] sm:$0xff]
    %v59 = vld [vmem:[%s6 + $0x10] sm:$0xff]
    %v60 = vld [vmem:[%s6 + $0x18] sm:$0xff]
    %v61 = vld [vmem:[%s6 + $0x20] sm:$0xff]
    %v62 = vld [vmem:[%s6 + $0x28] sm:$0xff]
    %v63 = vld [vmem:[%s6 + $0x30] sm:$0xff]
    %v64 = vld [vmem:[%s6 + $0x38] sm:$0xff]
    %v65 = vld [vmem:[%s7] sm:$0x1]
    %v66 = vld [vmem:[%s8] sm:$0xff]
    %v67 = vld [vmem:[%s8 + $0x8] sm:$0xff]
    %v68 = vld [vmem:[%s8 + $0x10] sm:$0xff]
    %v69 = vld [vmem:[%s8 + $0x18] sm:$0xff]
    %v70 = vld [vmem:[%s8 + $0x20] sm:$0xff]
    %v71 = vld [vmem:[%s8 + $0x28] sm:$0xff]
    %v72 = vld [vmem:[%s8 + $0x30] sm:$0xff]
    %v73 = vld [vmem:[%s8 + $0x38] sm:$0xff]
    %v74 = vld [vmem:[%s9] sm:$0xff]
    %v75 = vld [vmem:[%s9 + $0x8] sm:$0xff]
    %v76 = vld [vmem:[%s9 + $0x10] sm:$0xff]
    %v77 = vld [vmem:[%s9 + $0x18] sm:$0xff]
    %v78 = vld [vmem:[%s9 + $0x20] sm:$0xff]
    %v79 = vld [vmem:[%s9 + $0x28] sm:$0xff]
    %v80 = vld [vmem:[%s9 + $0x30] sm:$0xff]
    %v81 = vld [vmem:[%s9 + $0x38] sm:$0xff]
    %v82 = vld [vmem:[%s0] sm:$0xff]
    %v83 = vld [vmem:[%s0 + $0x8] sm:$0xff]
    %v84 = vld [vmem:[%s0 + $0x10] sm:$0xff]
    %v85 = vld [vmem:[%s0 + $0x18] sm:$0xff]
    %v86 = vld [vmem:[%s0 + $0x20] sm:$0xff]
    %v87 = vld [vmem:[%s0 + $0x28] sm:$0xff]
    %v88 = vld [vmem:[%s0 + $0x30] sm:$0xff]
    %v89 = vld [vmem:[%s0 + $0x38] sm:$0xff]
    %v90 = vld [vmem:[%s1] sm:$0xff]
    %v91 = vld [vmem:[%s1 + $0x8] sm:$0xff]
    %v92 = vld [vmem:[%s1 + $0x10] sm:$0xff]
    %v93 = vld [vmem:[%s1 + $0x18] sm:$0xff]
    %v94 = vld [vmem:[%s1 + $0x20] sm:$0xff]
    %v95 = vld [vmem:[%s1 + $0x28] sm:$0xff]
    %v96 = vld [vmem:[%s1 + $0x30] sm:$0xff]
    %v97 = vld [vmem:[%s1 + $0x38] sm:$0xff]
    %v98 = vadd.bf16 %v82, %v90
    %v99 = vadd.bf16 %v83, %v91
    %v100 = vadd.bf16 %v84, %v92
    %v101 = vadd.bf16 %v85, %v93
    %v102 = vadd.bf16 %v86, %v94
    %v103 = vadd.bf16 %v87, %v95
    %v104 = vadd.bf16 %v88, %v96
    %v105 = vadd.bf16 %v89, %v97
    %107 = vset.pattern.permute.xlu0 0
    %108 = vperm.xlu0 %107, %v39
    %v109 = vpop.permute.xlu0 %108
    %112 = vset.pattern.permute.xlu0 0
    %113 = vperm.xlu0 %112, %v40
    %v114 = vpop.permute.xlu0 %113
    %v118 = vunpack.c.l.b16 %v37
    %v119 = vunpack.c.l.b16 %v38
    %v120 = vpack.c.b16 %v119, %v118
    %v129 = vunpack.c.l.b16 %v98
    %v130 = vunpack.c.h.b16 %v98
    %v131 = vunpack.c.l.b16 %v99
    %v132 = vunpack.c.h.b16 %v99
    %v133 = vunpack.c.l.b16 %v100
    %v134 = vunpack.c.h.b16 %v100
    %v135 = vunpack.c.l.b16 %v101
    %v136 = vunpack.c.h.b16 %v101
    %v137 = vunpack.c.l.b16 %v102
    %v138 = vunpack.c.h.b16 %v102
    %v139 = vunpack.c.l.b16 %v103
    %v140 = vunpack.c.h.b16 %v103
    %v141 = vunpack.c.l.b16 %v104
    %v142 = vunpack.c.h.b16 %v104
    %v143 = vunpack.c.l.b16 %v105
    %v144 = vunpack.c.h.b16 %v105
    %v145 = vpack.c.b16 %v131, %v129
    %v146 = vpack.c.b16 %v132, %v130
    %v147 = vpack.c.b16 %v135, %v133
    %v148 = vpack.c.b16 %v136, %v134
    %v149 = vpack.c.b16 %v139, %v137
    %v150 = vpack.c.b16 %v140, %v138
    %v151 = vpack.c.b16 %v143, %v141
    %v152 = vpack.c.b16 %v144, %v142
    %vm161 = vcmask 523264
    %v163 = vsel %vm161, %v120, 0
    %165 = vmatprep.subr.bf16.mxu0 %v146
    %166 = vmatpush1.bf16.msra.mxu0 %v145
    %167 = vmatprep.subr.bf16.mxu0 %v148
    %168 = vmatpush1.bf16.msra.mxu0 %v147
    %169 = vmatprep.subr.bf16.mxu0 %v150
    %170 = vmatpush1.bf16.msra.mxu0 %v149
    %171 = vmatprep.subr.bf16.mxu0 %v152
    %172 = vmatpush1.bf16.msra.mxu0 %v151
    %173 = vmatprep.subr.bf16.mxu0 0
    %174 = vmatpush1.bf16.msra.mxu0 0
    %175 = vmatprep.subr.bf16.mxu0 0
    %176 = vmatpush1.bf16.msra.mxu0 0
    %177 = vmatprep.subr.bf16.mxu0 0
    %178 = vmatpush1.bf16.msra.mxu0 0
    %179 = vmatprep.subr.bf16.mxu0 0
    %180 = vmatpush1.bf16.msra.mxu0 0
    %181 = vmatprep.subr.bf16.mxu0 0
    %182 = vmatpush1.bf16.msra.mxu0 0
    %183 = vmatprep.subr.bf16.mxu0 0
    %184 = vmatpush1.bf16.msra.mxu0 0
    %185 = vmatprep.subr.bf16.mxu0 0
    %186 = vmatpush1.bf16.msra.mxu0 0
    %187 = vmatprep.subr.bf16.mxu0 0
    %188 = vmatpush1.bf16.msra.mxu0 0
    %189 = vmatprep.subr.bf16.mxu0 0
    %190 = vmatpush1.bf16.msra.mxu0 0
    %191 = vmatprep.subr.bf16.mxu0 0
    %192 = vmatpush1.bf16.msra.mxu0 0
    %193 = vmatprep.subr.bf16.mxu0 0
    %194 = vmatpush1.bf16.msra.mxu0 0
    %195 = vmatprep.subr.bf16.mxu0 0
    %196 = vmatpush1.bf16.msra.mxu0 0
    %197 = vmatprep.mubr.bf16.mxu0 0
    %198 = vmatmul.mubr.bf16.gmra.mrb[0].mxu0 %v163
    %v199 = vpop.f32.mrb[0].mxu0
    %v200 = vadd.f32 %v109, %v199
    %v201 = vpop.f32.mrb[0].mxu0
    %v202 = vadd.f32 %v109, %v201
    %v203 = vpop.f32.mrb[0].mxu0
    %v204 = vadd.f32 %v114, %v203
    %v205 = vpop.f32.mrb[0].mxu0
    %v206 = vadd.f32 %v114, %v205
    %207 = vdwg.mxu0
    %v208 = vmax.f32 %v200, 0.0
    %v209 = vmax.f32 %v202, 0.0
    %v210 = vmax.f32 %v204, 0.0
    %v211 = vmax.f32 %v206, 0.0
    %v212 = vpack.c.bf16 %v210, %v208
    %v213 = vpack.c.bf16 %v211, %v209
    %v214 = vunpack.c.l.bf16 %v98
    %v215 = vunpack.c.h.bf16 %v98
    %v216 = vunpack.c.l.bf16 %v99
    %v217 = vunpack.c.h.bf16 %v99
    %v218 = vunpack.c.l.bf16 %v100
    %v219 = vunpack.c.h.bf16 %v100
    %v220 = vunpack.c.l.bf16 %v101
    %v221 = vunpack.c.h.bf16 %v101
    %v222 = vunpack.c.l.bf16 %v102
    %v223 = vunpack.c.h.bf16 %v102
    %v224 = vunpack.c.l.bf16 %v103
    %v225 = vunpack.c.h.bf16 %v103
    %v226 = vunpack.c.l.bf16 %v104
    %v227 = vunpack.c.h.bf16 %v104
    %v228 = vunpack.c.l.bf16 %v105
    %v229 = vunpack.c.h.bf16 %v105
    %v230 = vadd.f32 %v214, %v215
    %231 = vadd.xlane.f32.xlu0 %v230
    %v232 = vpop.xlane.xlu0 %231
    %v233 = vadd.f32 %v216, %v217
    %234 = vadd.xlane.f32.xlu0 %v233
    %v235 = vpop.xlane.xlu0 %234
    %v236 = vadd.f32 %v218, %v219
    %237 = vadd.xlane.f32.xlu0 %v236
    %v238 = vpop.xlane.xlu0 %237
    %v239 = vadd.f32 %v220, %v221
    %240 = vadd.xlane.f32.xlu0 %v239
    %v241 = vpop.xlane.xlu0 %240
    %v242 = vadd.f32 %v222, %v223
    %243 = vadd.xlane.f32.xlu0 %v242
    %v244 = vpop.xlane.xlu0 %243
    %v245 = vadd.f32 %v224, %v225
    %246 = vadd.xlane.f32.xlu0 %v245
    %v247 = vpop.xlane.xlu0 %246
    %v248 = vadd.f32 %v226, %v227
    %249 = vadd.xlane.f32.xlu0 %v248
    %v250 = vpop.xlane.xlu0 %249
    %v251 = vadd.f32 %v228, %v229
    %252 = vadd.xlane.f32.xlu0 %v251
    %v253 = vpop.xlane.xlu0 %252
    %v254 = vrcp.pop 256.0
    %v255 = vmul.f32 %v232, %v254
    %v256 = vmul.f32 %v235, %v254
    %v257 = vmul.f32 %v238, %v254
    %v258 = vmul.f32 %v241, %v254
    %v259 = vmul.f32 %v244, %v254
    %v260 = vmul.f32 %v247, %v254
    %v261 = vmul.f32 %v250, %v254
    %v262 = vmul.f32 %v253, %v254
    %v263 = vmul.f32 %v57, %v255
    %v264 = vmul.f32 %v58, %v256
    %v265 = vmul.f32 %v59, %v257
    %v266 = vmul.f32 %v60, %v258
    %v267 = vmul.f32 %v61, %v259
    %v268 = vmul.f32 %v62, %v260
    %v269 = vmul.f32 %v63, %v261
    %v270 = vmul.f32 %v64, %v262
    %vm271 = vcmask 130048
    %v272 = vsel %vm271, %v263, 0.0
    %v273 = vsel %vm271, %v264, 0.0
    %v274 = vadd.f32 %v272, %v273
    %v275 = vsel %vm271, %v265, 0.0
    %v276 = vadd.f32 %v274, %v275
    %v277 = vsel %vm271, %v266, 0.0
    %v278 = vadd.f32 %v276, %v277
    %v279 = vsel %vm271, %v267, 0.0
    %v280 = vadd.f32 %v278, %v279
    %v281 = vsel %vm271, %v268, 0.0
    %v282 = vadd.f32 %v280, %v281
    %v283 = vsel %vm271, %v269, 0.0
    %v284 = vadd.f32 %v282, %v283
    %v285 = vsel %vm271, %v270, 0.0
    %v286 = vadd.f32 %v284, %v285
    %v287 = vrot.slane %v286, 4
    %v288 = vadd.f32 %v286, %v287
    %v289 = vrot.slane %v288, 2
    %v290 = vadd.f32 %v288, %v289
    %v291 = vrot.slane %v290, 1
    %v292 = vadd.f32 %v290, %v291
    %v293 = vadd.f32 %v292, %v65
    %v294 = vmax.f32 %v293, 0.0
    %v295 = vlaneseq
    %v296 = vshrl.u32 %v295, 7
    %v297 = vsub.s32 0, %v296
    %v298 = vrot.slane %v294, %v297
    %v299 = vmul.f32 %v66, %v298
    %v300 = vmul.f32 %v67, %v298
    %v301 = vmul.f32 %v68, %v298
    %v302 = vmul.f32 %v69, %v298
    %v303 = vmul.f32 %v70, %v298
    %v304 = vmul.f32 %v71, %v298
    %v305 = vmul.f32 %v72, %v298
    %v306 = vmul.f32 %v73, %v298
    %v307 = vsel %vm271, %v299, 0.0
    %308 = vadd.xlane.f32.xlu0 %v307
    %v309 = vpop.xlane.xlu0 %308
    %v310 = vsel %vm271, %v300, 0.0
    %311 = vadd.xlane.f32.xlu0 %v310
    %v312 = vpop.xlane.xlu0 %311
    %v313 = vsel %vm271, %v301, 0.0
    %314 = vadd.xlane.f32.xlu0 %v313
    %v315 = vpop.xlane.xlu0 %314
    %v316 = vsel %vm271, %v302, 0.0
    %317 = vadd.xlane.f32.xlu0 %v316
    %v318 = vpop.xlane.xlu0 %317
    %v319 = vsel %vm271, %v303, 0.0
    %320 = vadd.xlane.f32.xlu0 %v319
    %v321 = vpop.xlane.xlu0 %320
    %v322 = vsel %vm271, %v304, 0.0
    %323 = vadd.xlane.f32.xlu0 %v322
    %v324 = vpop.xlane.xlu0 %323
    %v325 = vsel %vm271, %v305, 0.0
    %326 = vadd.xlane.f32.xlu0 %v325
    %v327 = vpop.xlane.xlu0 %326
    %v328 = vsel %vm271, %v306, 0.0
    %329 = vadd.xlane.f32.xlu0 %v328
    %v330 = vpop.xlane.xlu0 %329
    %v331 = vadd.f32 %v309, %v74
    %v332 = vadd.f32 %v312, %v75
    %v333 = vadd.f32 %v315, %v76
    %v334 = vadd.f32 %v318, %v77
    %v335 = vadd.f32 %v321, %v78
    %v336 = vadd.f32 %v324, %v79
    %v337 = vadd.f32 %v327, %v80
    %v338 = vadd.f32 %v330, %v81
    %v339 = vadd.f32 %v49, %v331
    %v340 = vadd.f32 %v50, %v332
    %v341 = vadd.f32 %v51, %v333
    %v342 = vadd.f32 %v52, %v334
    %v343 = vadd.f32 %v53, %v335
    %v344 = vadd.f32 %v54, %v336
    %v345 = vadd.f32 %v55, %v337
    %v346 = vadd.f32 %v56, %v338
    %348 = vset.pattern.permute.xlu0 0
    %349 = vperm.xlu0 %348, %v339
    %v350 = vpop.permute.xlu0 %349
    %353 = vset.pattern.permute.xlu0 0
    %354 = vperm.xlu0 %353, %v340
    %v355 = vpop.permute.xlu0 %354
    %358 = vset.pattern.permute.xlu0 0
    %359 = vperm.xlu0 %358, %v341
    %v360 = vpop.permute.xlu0 %359
    %363 = vset.pattern.permute.xlu0 0
    %364 = vperm.xlu0 %363, %v342
    %v365 = vpop.permute.xlu0 %364
    %368 = vset.pattern.permute.xlu0 0
    %369 = vperm.xlu0 %368, %v343
    %v370 = vpop.permute.xlu0 %369
    %373 = vset.pattern.permute.xlu0 0
    %374 = vperm.xlu0 %373, %v344
    %v375 = vpop.permute.xlu0 %374
    %378 = vset.pattern.permute.xlu0 0
    %379 = vperm.xlu0 %378, %v345
    %v380 = vpop.permute.xlu0 %379
    %383 = vset.pattern.permute.xlu0 0
    %384 = vperm.xlu0 %383, %v346
    %v385 = vpop.permute.xlu0 %384
    %v395 = vunpack.c.l.b16 %v41
    %v396 = vunpack.c.l.b16 %v42
    %v397 = vunpack.c.l.b16 %v43
    %v398 = vunpack.c.l.b16 %v44
    %v399 = vunpack.c.l.b16 %v45
    %v400 = vunpack.c.l.b16 %v46
    %v401 = vunpack.c.l.b16 %v47
    %v402 = vunpack.c.l.b16 %v48
    %v403 = vpack.c.b16 %v396, %v395
    %v404 = vpack.c.b16 %v398, %v397
    %v405 = vpack.c.b16 %v400, %v399
    %v406 = vpack.c.b16 %v402, %v401
    %v408 = vsel %vm271, %v403, 0
    %v411 = vsel %vm271, %v404, 0
    %v414 = vsel %vm271, %v405, 0
    %v417 = vsel %vm271, %v406, 0
    %419 = vmatprep.subr.bf16.mxu0 %v213
    %420 = vmatpush1.bf16.msra.mxu0 %v212
    %421 = vmatprep.subr.bf16.mxu0 0
    %422 = vmatpush1.bf16.msra.mxu0 0
    %423 = vmatprep.subr.bf16.mxu0 0
    %424 = vmatpush1.bf16.msra.mxu0 0
    %425 = vmatprep.subr.bf16.mxu0 0
    %426 = vmatpush1.bf16.msra.mxu0 0
    %427 = vmatprep.subr.bf16.mxu0 0
    %428 = vmatpush1.bf16.msra.mxu0 0
    %429 = vmatprep.subr.bf16.mxu0 0
    %430 = vmatpush1.bf16.msra.mxu0 0
    %431 = vmatprep.subr.bf16.mxu0 0
    %432 = vmatpush1.bf16.msra.mxu0 0
    %433 = vmatprep.subr.bf16.mxu0 0
    %434 = vmatpush1.bf16.msra.mxu0 0
    %435 = vmatprep.subr.bf16.mxu0 0
    %436 = vmatpush1.bf16.msra.mxu0 0
    %437 = vmatprep.subr.bf16.mxu0 0
    %438 = vmatpush1.bf16.msra.mxu0 0
    %439 = vmatprep.subr.bf16.mxu0 0
    %440 = vmatpush1.bf16.msra.mxu0 0
    %441 = vmatprep.subr.bf16.mxu0 0
    %442 = vmatpush1.bf16.msra.mxu0 0
    %443 = vmatprep.subr.bf16.mxu0 0
    %444 = vmatpush1.bf16.msra.mxu0 0
    %445 = vmatprep.subr.bf16.mxu0 0
    %446 = vmatpush1.bf16.msra.mxu0 0
    %447 = vmatprep.subr.bf16.mxu0 0
    %448 = vmatpush1.bf16.msra.mxu0 0
    %449 = vmatprep.subr.bf16.mxu0 0
    %450 = vmatpush1.bf16.msra.mxu0 0
    %451 = vmatprep.mubr.bf16.mxu0 0
    %452 = vmatmul.mubr.bf16.gmra.mrb[0].mxu0 %v408
    %v453 = vpop.f32.mrb[0].mxu0
    %v454 = vadd.f32 %v350, %v453
    %v455 = vpop.f32.mrb[0].mxu0
    %v456 = vadd.f32 %v350, %v455
    %v457 = vpop.f32.mrb[0].mxu0
    %v458 = vadd.f32 %v355, %v457
    %v459 = vpop.f32.mrb[0].mxu0
    %v460 = vadd.f32 %v355, %v459
    %461 = vmatprep.mubr.bf16.mxu0 0
    %462 = vmatmul.mubr.bf16.gmra.mrb[0].mxu0 %v411
    %v463 = vpop.f32.mrb[0].mxu0
    %v464 = vadd.f32 %v360, %v463
    %v465 = vpop.f32.mrb[0].mxu0
    %v466 = vadd.f32 %v360, %v465
    %v467 = vpop.f32.mrb[0].mxu0
    %v468 = vadd.f32 %v365, %v467
    %v469 = vpop.f32.mrb[0].mxu0
    %v470 = vadd.f32 %v365, %v469
    %471 = vmatprep.mubr.bf16.mxu0 0
    %472 = vmatmul.mubr.bf16.gmra.mrb[0].mxu0 %v414
    %v473 = vpop.f32.mrb[0].mxu0
    %v474 = vadd.f32 %v370, %v473
    %v475 = vpop.f32.mrb[0].mxu0
    %v476 = vadd.f32 %v370, %v475
    %v477 = vpop.f32.mrb[0].mxu0
    %v478 = vadd.f32 %v375, %v477
    %v479 = vpop.f32.mrb[0].mxu0
    %v480 = vadd.f32 %v375, %v479
    %481 = vmatprep.mubr.bf16.mxu0 0
    %482 = vmatmul.mubr.bf16.gmra.mrb[0].mxu0 %v417
    %v483 = vpop.f32.mrb[0].mxu0
    %v484 = vadd.f32 %v380, %v483
    %v485 = vpop.f32.mrb[0].mxu0
    %v486 = vadd.f32 %v380, %v485
    %v487 = vpop.f32.mrb[0].mxu0
    %v488 = vadd.f32 %v385, %v487
    %v489 = vpop.f32.mrb[0].mxu0
    %v490 = vadd.f32 %v385, %v489
    %491 = vdwg.mxu0
    %v492 = vmul.f32 %v454, 0.5
    %v493 = vmul.f32 %v456, 0.5
    %v494 = vmul.f32 %v458, 0.5
    %v495 = vmul.f32 %v460, 0.5
    %v496 = vmul.f32 %v464, 0.5
    %v497 = vmul.f32 %v466, 0.5
    %v498 = vmul.f32 %v468, 0.5
    %v499 = vmul.f32 %v470, 0.5
    %v500 = vmul.f32 %v474, 0.5
    %v501 = vmul.f32 %v476, 0.5
    %v502 = vmul.f32 %v478, 0.5
    %v503 = vmul.f32 %v480, 0.5
    %v504 = vmul.f32 %v484, 0.5
    %v505 = vmul.f32 %v486, 0.5
    %v506 = vmul.f32 %v488, 0.5
    %v507 = vmul.f32 %v490, 0.5
    %v508 = vtanh.pop %v492
    %v509 = vtanh.pop %v493
    %v510 = vtanh.pop %v494
    %v511 = vtanh.pop %v495
    %v512 = vtanh.pop %v496
    %v513 = vtanh.pop %v497
    %v514 = vtanh.pop %v498
    %v515 = vtanh.pop %v499
    %v516 = vtanh.pop %v500
    %v517 = vtanh.pop %v501
    %v518 = vtanh.pop %v502
    %v519 = vtanh.pop %v503
    %v520 = vtanh.pop %v504
    %v521 = vtanh.pop %v505
    %v522 = vtanh.pop %v506
    %v523 = vtanh.pop %v507
    %v524 = vunpack.c.l.bf16 %v82
    %v525 = vunpack.c.h.bf16 %v82
    %v526 = vunpack.c.l.bf16 %v83
    %v527 = vunpack.c.h.bf16 %v83
    %v528 = vunpack.c.l.bf16 %v84
    %v529 = vunpack.c.h.bf16 %v84
    %v530 = vunpack.c.l.bf16 %v85
    %v531 = vunpack.c.h.bf16 %v85
    %v532 = vunpack.c.l.bf16 %v86
    %v533 = vunpack.c.h.bf16 %v86
    %v534 = vunpack.c.l.bf16 %v87
    %v535 = vunpack.c.h.bf16 %v87
    %v536 = vunpack.c.l.bf16 %v88
    %v537 = vunpack.c.h.bf16 %v88
    %v538 = vunpack.c.l.bf16 %v89
    %v539 = vunpack.c.h.bf16 %v89
    %v540 = vunpack.c.l.bf16 %v90
    %v541 = vunpack.c.h.bf16 %v90
    %v542 = vunpack.c.l.bf16 %v91
    %v543 = vunpack.c.h.bf16 %v91
    %v544 = vunpack.c.l.bf16 %v92
    %v545 = vunpack.c.h.bf16 %v92
    %v546 = vunpack.c.l.bf16 %v93
    %v547 = vunpack.c.h.bf16 %v93
    %v548 = vunpack.c.l.bf16 %v94
    %v549 = vunpack.c.h.bf16 %v94
    %v550 = vunpack.c.l.bf16 %v95
    %v551 = vunpack.c.h.bf16 %v95
    %v552 = vunpack.c.l.bf16 %v96
    %v553 = vunpack.c.h.bf16 %v96
    %v554 = vunpack.c.l.bf16 %v97
    %v555 = vunpack.c.h.bf16 %v97
    %v556 = vadd.f32 %v524, %v540
    %v557 = vadd.f32 %v525, %v541
    %v558 = vadd.f32 %v526, %v542
    %v559 = vadd.f32 %v527, %v543
    %v560 = vadd.f32 %v528, %v544
    %v561 = vadd.f32 %v529, %v545
    %v562 = vadd.f32 %v530, %v546
    %v563 = vadd.f32 %v531, %v547
    %v564 = vadd.f32 %v532, %v548
    %v565 = vadd.f32 %v533, %v549
    %v566 = vadd.f32 %v534, %v550
    %v567 = vadd.f32 %v535, %v551
    %v568 = vadd.f32 %v536, %v552
    %v569 = vadd.f32 %v537, %v553
    %v570 = vadd.f32 %v538, %v554
    %v571 = vadd.f32 %v539, %v555
    %v572 = vsub.f32 %v524, %v540
    %v573 = vsub.f32 %v525, %v541
    %v574 = vsub.f32 %v526, %v542
    %v575 = vsub.f32 %v527, %v543
    %v576 = vsub.f32 %v528, %v544
    %v577 = vsub.f32 %v529, %v545
    %v578 = vsub.f32 %v530, %v546
    %v579 = vsub.f32 %v531, %v547
    %v580 = vsub.f32 %v532, %v548
    %v581 = vsub.f32 %v533, %v549
    %v582 = vsub.f32 %v534, %v550
    %v583 = vsub.f32 %v535, %v551
    %v584 = vsub.f32 %v536, %v552
    %v585 = vsub.f32 %v537, %v553
    %v586 = vsub.f32 %v538, %v554
    %v587 = vsub.f32 %v539, %v555
    %v588 = vmul.f32 %v572, %v508
    %v589 = vmul.f32 %v573, %v509
    %v590 = vmul.f32 %v574, %v510
    %v591 = vmul.f32 %v575, %v511
    %v592 = vmul.f32 %v576, %v512
    %v593 = vmul.f32 %v577, %v513
    %v594 = vmul.f32 %v578, %v514
    %v595 = vmul.f32 %v579, %v515
    %v596 = vmul.f32 %v580, %v516
    %v597 = vmul.f32 %v581, %v517
    %v598 = vmul.f32 %v582, %v518
    %v599 = vmul.f32 %v583, %v519
    %v600 = vmul.f32 %v584, %v520
    %v601 = vmul.f32 %v585, %v521
    %v602 = vmul.f32 %v586, %v522
    %v603 = vmul.f32 %v587, %v523
    %v604 = vadd.f32 %v556, %v588
    %v605 = vadd.f32 %v557, %v589
    %v606 = vadd.f32 %v558, %v590
    %v607 = vadd.f32 %v559, %v591
    %v608 = vadd.f32 %v560, %v592
    %v609 = vadd.f32 %v561, %v593
    %v610 = vadd.f32 %v562, %v594
    %v611 = vadd.f32 %v563, %v595
    %v612 = vadd.f32 %v564, %v596
    %v613 = vadd.f32 %v565, %v597
    %v614 = vadd.f32 %v566, %v598
    %v615 = vadd.f32 %v567, %v599
    %v616 = vadd.f32 %v568, %v600
    %v617 = vadd.f32 %v569, %v601
    %v618 = vadd.f32 %v570, %v602
    %v619 = vadd.f32 %v571, %v603
    %v620 = vpack.c.bf16 %v606, %v604
    %v621 = vpack.c.bf16 %v607, %v605
    %v622 = vpack.c.bf16 %v610, %v608
    %v623 = vpack.c.bf16 %v611, %v609
    %v624 = vpack.c.bf16 %v614, %v612
    %v625 = vpack.c.bf16 %v615, %v613
    %v626 = vpack.c.bf16 %v618, %v616
    %v627 = vpack.c.bf16 %v619, %v617
    %v636 = vunpack.c.l.b16 %v620
    %v637 = vunpack.c.l.b16 %v621
    %v638 = vunpack.c.h.b16 %v620
    %v639 = vunpack.c.h.b16 %v621
    %v640 = vunpack.c.l.b16 %v622
    %v641 = vunpack.c.l.b16 %v623
    %v642 = vunpack.c.h.b16 %v622
    %v643 = vunpack.c.h.b16 %v623
    %v644 = vunpack.c.l.b16 %v624
    %v645 = vunpack.c.l.b16 %v625
    %v646 = vunpack.c.h.b16 %v624
    %v647 = vunpack.c.h.b16 %v625
    %v648 = vunpack.c.l.b16 %v626
    %v649 = vunpack.c.l.b16 %v627
    %v650 = vunpack.c.h.b16 %v626
    %v651 = vunpack.c.h.b16 %v627
    %v652 = vpack.c.b16 %v637, %v636
    %v653 = vpack.c.b16 %v639, %v638
    %v654 = vpack.c.b16 %v641, %v640
    %v655 = vpack.c.b16 %v643, %v642
    %v656 = vpack.c.b16 %v645, %v644
    %v657 = vpack.c.b16 %v647, %v646
    %v658 = vpack.c.b16 %v649, %v648
    %v659 = vpack.c.b16 %v651, %v650
    %668 = vst [vmem:[#allocation2] sm:$0xff] %v652
    %669 = vst [vmem:[#allocation2 + $0x8] sm:$0xff] %v653
    %670 = vst [vmem:[#allocation2 + $0x10] sm:$0xff] %v654
    %671 = vst [vmem:[#allocation2 + $0x18] sm:$0xff] %v655
    %672 = vst [vmem:[#allocation2 + $0x20] sm:$0xff] %v656
    %673 = vst [vmem:[#allocation2 + $0x28] sm:$0xff] %v657
    %674 = vst [vmem:[#allocation2 + $0x30] sm:$0xff] %v658
    %675 = vst [vmem:[#allocation2 + $0x38] sm:$0xff] %v659
    %s676 = scalar_lea.vmem %s0, 64
    %v677 = vld [vmem:[%s676] sm:$0xff]
    %v678 = vld [vmem:[%s676 + $0x8] sm:$0xff]
    %v679 = vld [vmem:[%s676 + $0x10] sm:$0xff]
    %v680 = vld [vmem:[%s676 + $0x18] sm:$0xff]
    %v681 = vld [vmem:[%s676 + $0x20] sm:$0xff]
    %v682 = vld [vmem:[%s676 + $0x28] sm:$0xff]
    %v683 = vld [vmem:[%s676 + $0x30] sm:$0xff]
    %v684 = vld [vmem:[%s676 + $0x38] sm:$0xff]
    %s685 = scalar_lea.vmem %s1, 64
    %v686 = vld [vmem:[%s685] sm:$0xff]
    %v687 = vld [vmem:[%s685 + $0x8] sm:$0xff]
    %v688 = vld [vmem:[%s685 + $0x10] sm:$0xff]
    %v689 = vld [vmem:[%s685 + $0x18] sm:$0xff]
    %v690 = vld [vmem:[%s685 + $0x20] sm:$0xff]
    %v691 = vld [vmem:[%s685 + $0x28] sm:$0xff]
    %v692 = vld [vmem:[%s685 + $0x30] sm:$0xff]
    %v693 = vld [vmem:[%s685 + $0x38] sm:$0xff]
    %v694 = vadd.bf16 %v677, %v686
    %v695 = vadd.bf16 %v678, %v687
    %v696 = vadd.bf16 %v679, %v688
    %v697 = vadd.bf16 %v680, %v689
    %v698 = vadd.bf16 %v681, %v690
    %v699 = vadd.bf16 %v682, %v691
    %v700 = vadd.bf16 %v683, %v692
    %v701 = vadd.bf16 %v684, %v693
    %v710 = vunpack.c.l.b16 %v694
    %v711 = vunpack.c.h.b16 %v694
    %v712 = vunpack.c.l.b16 %v695
    %v713 = vunpack.c.h.b16 %v695
    %v714 = vunpack.c.l.b16 %v696
    %v715 = vunpack.c.h.b16 %v696
    %v716 = vunpack.c.l.b16 %v697
    %v717 = vunpack.c.h.b16 %v697
    %v718 = vunpack.c.l.b16 %v698
    %v719 = vunpack.c.h.b16 %v698
    %v720 = vunpack.c.l.b16 %v699
    %v721 = vunpack.c.h.b16 %v699
    %v722 = vunpack.c.l.b16 %v700
    %v723 = vunpack.c.h.b16 %v700
    %v724 = vunpack.c.l.b16 %v701
    %v725 = vunpack.c.h.b16 %v701
    %v726 = vpack.c.b16 %v712, %v710
    %v727 = vpack.c.b16 %v713, %v711
    %v728 = vpack.c.b16 %v716, %v714
    %v729 = vpack.c.b16 %v717, %v715
    %v730 = vpack.c.b16 %v720, %v718
    %v731 = vpack.c.b16 %v721, %v719
    %v732 = vpack.c.b16 %v724, %v722
    %v733 = vpack.c.b16 %v725, %v723
    %742 = vmatprep.subr.bf16.mxu0 %v727
    %743 = vmatpush1.bf16.msra.mxu0 %v726
    %744 = vmatprep.subr.bf16.mxu0 %v729
    %745 = vmatpush1.bf16.msra.mxu0 %v728
    %746 = vmatprep.subr.bf16.mxu0 %v731
    %747 = vmatpush1.bf16.msra.mxu0 %v730
    %748 = vmatprep.subr.bf16.mxu0 %v733
    %749 = vmatpush1.bf16.msra.mxu0 %v732
    %750 = vmatprep.subr.bf16.mxu0 0
    %751 = vmatpush1.bf16.msra.mxu0 0
    %752 = vmatprep.subr.bf16.mxu0 0
    %753 = vmatpush1.bf16.msra.mxu0 0
    %754 = vmatprep.subr.bf16.mxu0 0
    %755 = vmatpush1.bf16.msra.mxu0 0
    %756 = vmatprep.subr.bf16.mxu0 0
    %757 = vmatpush1.bf16.msra.mxu0 0
    %758 = vmatprep.subr.bf16.mxu0 0
    %759 = vmatpush1.bf16.msra.mxu0 0
    %760 = vmatprep.subr.bf16.mxu0 0
    %761 = vmatpush1.bf16.msra.mxu0 0
    %762 = vmatprep.subr.bf16.mxu0 0
    %763 = vmatpush1.bf16.msra.mxu0 0
    %764 = vmatprep.subr.bf16.mxu0 0
    %765 = vmatpush1.bf16.msra.mxu0 0
    %766 = vmatprep.subr.bf16.mxu0 0
    %767 = vmatpush1.bf16.msra.mxu0 0
    %768 = vmatprep.subr.bf16.mxu0 0
    %769 = vmatpush1.bf16.msra.mxu0 0
    %770 = vmatprep.subr.bf16.mxu0 0
    %771 = vmatpush1.bf16.msra.mxu0 0
    %772 = vmatprep.subr.bf16.mxu0 0
    %773 = vmatpush1.bf16.msra.mxu0 0
    %774 = vmatprep.mubr.bf16.mxu0 0
    %775 = vmatmul.mubr.bf16.gmra.mrb[0].mxu0 %v163
    %v776 = vpop.f32.mrb[0].mxu0
    %v777 = vadd.f32 %v109, %v776
    %v778 = vpop.f32.mrb[0].mxu0
    %v779 = vadd.f32 %v109, %v778
    %v780 = vpop.f32.mrb[0].mxu0
    %v781 = vadd.f32 %v114, %v780
    %v782 = vpop.f32.mrb[0].mxu0
    %v783 = vadd.f32 %v114, %v782
    %784 = vdwg.mxu0
    %v785 = vmax.f32 %v777, 0.0
    %v786 = vmax.f32 %v779, 0.0
    %v787 = vmax.f32 %v781, 0.0
    %v788 = vmax.f32 %v783, 0.0
    %v789 = vpack.c.bf16 %v787, %v785
    %v790 = vpack.c.bf16 %v788, %v786
    %v791 = vunpack.c.l.bf16 %v694
    %v792 = vunpack.c.h.bf16 %v694
    %v793 = vunpack.c.l.bf16 %v695
    %v794 = vunpack.c.h.bf16 %v695
    %v795 = vunpack.c.l.bf16 %v696
    %v796 = vunpack.c.h.bf16 %v696
    %v797 = vunpack.c.l.bf16 %v697
    %v798 = vunpack.c.h.bf16 %v697
    %v799 = vunpack.c.l.bf16 %v698
    %v800 = vunpack.c.h.bf16 %v698
    %v801 = vunpack.c.l.bf16 %v699
    %v802 = vunpack.c.h.bf16 %v699
    %v803 = vunpack.c.l.bf16 %v700
    %v804 = vunpack.c.h.bf16 %v700
    %v805 = vunpack.c.l.bf16 %v701
    %v806 = vunpack.c.h.bf16 %v701
    %v807 = vadd.f32 %v791, %v792
    %808 = vadd.xlane.f32.xlu0 %v807
    %v809 = vpop.xlane.xlu0 %808
    %v810 = vadd.f32 %v793, %v794
    %811 = vadd.xlane.f32.xlu0 %v810
    %v812 = vpop.xlane.xlu0 %811
    %v813 = vadd.f32 %v795, %v796
    %814 = vadd.xlane.f32.xlu0 %v813
    %v815 = vpop.xlane.xlu0 %814
    %v816 = vadd.f32 %v797, %v798
    %817 = vadd.xlane.f32.xlu0 %v816
    %v818 = vpop.xlane.xlu0 %817
    %v819 = vadd.f32 %v799, %v800
    %820 = vadd.xlane.f32.xlu0 %v819
    %v821 = vpop.xlane.xlu0 %820
    %v822 = vadd.f32 %v801, %v802
    %823 = vadd.xlane.f32.xlu0 %v822
    %v824 = vpop.xlane.xlu0 %823
    %v825 = vadd.f32 %v803, %v804
    %826 = vadd.xlane.f32.xlu0 %v825
    %v827 = vpop.xlane.xlu0 %826
    %v828 = vadd.f32 %v805, %v806
    %829 = vadd.xlane.f32.xlu0 %v828
    %v830 = vpop.xlane.xlu0 %829
    %v831 = vmul.f32 %v809, %v254
    %v832 = vmul.f32 %v812, %v254
    %v833 = vmul.f32 %v815, %v254
    %v834 = vmul.f32 %v818, %v254
    %v835 = vmul.f32 %v821, %v254
    %v836 = vmul.f32 %v824, %v254
    %v837 = vmul.f32 %v827, %v254
    %v838 = vmul.f32 %v830, %v254
    %v839 = vmul.f32 %v57, %v831
    %v840 = vmul.f32 %v58, %v832
    %v841 = vmul.f32 %v59, %v833
    %v842 = vmul.f32 %v60, %v834
    %v843 = vmul.f32 %v61, %v835
    %v844 = vmul.f32 %v62, %v836
    %v845 = vmul.f32 %v63, %v837
    %v846 = vmul.f32 %v64, %v838
    %v847 = vsel %vm271, %v839, 0.0
    %v848 = vsel %vm271, %v840, 0.0
    %v849 = vadd.f32 %v847, %v848
    %v850 = vsel %vm271, %v841, 0.0
    %v851 = vadd.f32 %v849, %v850
    %v852 = vsel %vm271, %v842, 0.0
    %v853 = vadd.f32 %v851, %v852
    %v854 = vsel %vm271, %v843, 0.0
    %v855 = vadd.f32 %v853, %v854
    %v856 = vsel %vm271, %v844, 0.0
    %v857 = vadd.f32 %v855, %v856
    %v858 = vsel %vm271, %v845, 0.0
    %v859 = vadd.f32 %v857, %v858
    %v860 = vsel %vm271, %v846, 0.0
    %v861 = vadd.f32 %v859, %v860
    %v862 = vrot.slane %v861, 4
    %v863 = vadd.f32 %v861, %v862
    %v864 = vrot.slane %v863, 2
    %v865 = vadd.f32 %v863, %v864
    %v866 = vrot.slane %v865, 1
    %v867 = vadd.f32 %v865, %v866
    %v868 = vadd.f32 %v867, %v65
    %v869 = vmax.f32 %v868, 0.0
    %v870 = vlaneseq
    %v871 = vshrl.u32 %v870, 7
    %v872 = vsub.s32 0, %v871
    %v873 = vrot.slane %v869, %v872
    %v874 = vmul.f32 %v66, %v873
    %v875 = vmul.f32 %v67, %v873
    %v876 = vmul.f32 %v68, %v873
    %v877 = vmul.f32 %v69, %v873
    %v878 = vmul.f32 %v70, %v873
    %v879 = vmul.f32 %v71, %v873
    %v880 = vmul.f32 %v72, %v873
    %v881 = vmul.f32 %v73, %v873
    %v882 = vsel %vm271, %v874, 0.0
    %883 = vadd.xlane.f32.xlu0 %v882
    %v884 = vpop.xlane.xlu0 %883
    %v885 = vsel %vm271, %v875, 0.0
    %886 = vadd.xlane.f32.xlu0 %v885
    %v887 = vpop.xlane.xlu0 %886
    %v888 = vsel %vm271, %v876, 0.0
    %889 = vadd.xlane.f32.xlu0 %v888
    %v890 = vpop.xlane.xlu0 %889
    %v891 = vsel %vm271, %v877, 0.0
    %892 = vadd.xlane.f32.xlu0 %v891
    %v893 = vpop.xlane.xlu0 %892
    %v894 = vsel %vm271, %v878, 0.0
    %895 = vadd.xlane.f32.xlu0 %v894
    %v896 = vpop.xlane.xlu0 %895
    %v897 = vsel %vm271, %v879, 0.0
    %898 = vadd.xlane.f32.xlu0 %v897
    %v899 = vpop.xlane.xlu0 %898
    %v900 = vsel %vm271, %v880, 0.0
    %901 = vadd.xlane.f32.xlu0 %v900
    %v902 = vpop.xlane.xlu0 %901
    %v903 = vsel %vm271, %v881, 0.0
    %904 = vadd.xlane.f32.xlu0 %v903
    %v905 = vpop.xlane.xlu0 %904
    %v906 = vadd.f32 %v884, %v74
    %v907 = vadd.f32 %v887, %v75
    %v908 = vadd.f32 %v890, %v76
    %v909 = vadd.f32 %v893, %v77
    %v910 = vadd.f32 %v896, %v78
    %v911 = vadd.f32 %v899, %v79
    %v912 = vadd.f32 %v902, %v80
    %v913 = vadd.f32 %v905, %v81
    %v914 = vadd.f32 %v49, %v906
    %v915 = vadd.f32 %v50, %v907
    %v916 = vadd.f32 %v51, %v908
    %v917 = vadd.f32 %v52, %v909
    %v918 = vadd.f32 %v53, %v910
    %v919 = vadd.f32 %v54, %v911
    %v920 = vadd.f32 %v55, %v912
    %v921 = vadd.f32 %v56, %v913
    %923 = vset.pattern.permute.xlu0 0
    %924 = vperm.xlu0 %923, %v914
    %v925 = vpop.permute.xlu0 %924
    %928 = vset.pattern.permute.xlu0 0
    %929 = vperm.xlu0 %928, %v915
    %v930 = vpop.permute.xlu0 %929
    %933 = vset.pattern.permute.xlu0 0
    %934 = vperm.xlu0 %933, %v916
    %v935 = vpop.permute.xlu0 %934
    %938 = vset.pattern.permute.xlu0 0
    %939 = vperm.xlu0 %938, %v917
    %v940 = vpop.permute.xlu0 %939
    %943 = vset.pattern.permute.xlu0 0
    %944 = vperm.xlu0 %943, %v918
    %v945 = vpop.permute.xlu0 %944
    %948 = vset.pattern.permute.xlu0 0
    %949 = vperm.xlu0 %948, %v919
    %v950 = vpop.permute.xlu0 %949
    %953 = vset.pattern.permute.xlu0 0
    %954 = vperm.xlu0 %953, %v920
    %v955 = vpop.permute.xlu0 %954
    %958 = vset.pattern.permute.xlu0 0
    %959 = vperm.xlu0 %958, %v921
    %v960 = vpop.permute.xlu0 %959
    %962 = vmatprep.subr.bf16.mxu0 %v790
    %963 = vmatpush1.bf16.msra.mxu0 %v789
    %964 = vmatprep.subr.bf16.mxu0 0
    %965 = vmatpush1.bf16.msra.mxu0 0
    %966 = vmatprep.subr.bf16.mxu0 0
    %967 = vmatpush1.bf16.msra.mxu0 0
    %968 = vmatprep.subr.bf16.mxu0 0
    %969 = vmatpush1.bf16.msra.mxu0 0
    %970 = vmatprep.subr.bf16.mxu0 0
    %971 = vmatpush1.bf16.msra.mxu0 0
    %972 = vmatprep.subr.bf16.mxu0 0
    %973 = vmatpush1.bf16.msra.mxu0 0
    %974 = vmatprep.subr.bf16.mxu0 0
    %975 = vmatpush1.bf16.msra.mxu0 0
    %976 = vmatprep.subr.bf16.mxu0 0
    %977 = vmatpush1.bf16.msra.mxu0 0
    %978 = vmatprep.subr.bf16.mxu0 0
    %979 = vmatpush1.bf16.msra.mxu0 0
    %980 = vmatprep.subr.bf16.mxu0 0
    %981 = vmatpush1.bf16.msra.mxu0 0
    %982 = vmatprep.subr.bf16.mxu0 0
    %983 = vmatpush1.bf16.msra.mxu0 0
    %984 = vmatprep.subr.bf16.mxu0 0
    %985 = vmatpush1.bf16.msra.mxu0 0
    %986 = vmatprep.subr.bf16.mxu0 0
    %987 = vmatpush1.bf16.msra.mxu0 0
    %988 = vmatprep.subr.bf16.mxu0 0
    %989 = vmatpush1.bf16.msra.mxu0 0
    %990 = vmatprep.subr.bf16.mxu0 0
    %991 = vmatpush1.bf16.msra.mxu0 0
    %992 = vmatprep.subr.bf16.mxu0 0
    %993 = vmatpush1.bf16.msra.mxu0 0
    %994 = vmatprep.mubr.bf16.mxu0 0
    %995 = vmatmul.mubr.bf16.gmra.mrb[0].mxu0 %v408
    %v996 = vpop.f32.mrb[0].mxu0
    %v997 = vadd.f32 %v925, %v996
    %v998 = vpop.f32.mrb[0].mxu0
    %v999 = vadd.f32 %v925, %v998
    %v1000 = vpop.f32.mrb[0].mxu0
    %v1001 = vadd.f32 %v930, %v1000
    %v1002 = vpop.f32.mrb[0].mxu0
    %v1003 = vadd.f32 %v930, %v1002
    %1004 = vmatprep.mubr.bf16.mxu0 0
    %1005 = vmatmul.mubr.bf16.gmra.mrb[0].mxu0 %v411
    %v1006 = vpop.f32.mrb[0].mxu0
    %v1007 = vadd.f32 %v935, %v1006
    %v1008 = vpop.f32.mrb[0].mxu0
    %v1009 = vadd.f32 %v935, %v1008
    %v1010 = vpop.f32.mrb[0].mxu0
    %v1011 = vadd.f32 %v940, %v1010
    %v1012 = vpop.f32.mrb[0].mxu0
    %v1013 = vadd.f32 %v940, %v1012
    %1014 = vmatprep.mubr.bf16.mxu0 0
    %1015 = vmatmul.mubr.bf16.gmra.mrb[0].mxu0 %v414
    %v1016 = vpop.f32.mrb[0].mxu0
    %v1017 = vadd.f32 %v945, %v1016
    %v1018 = vpop.f32.mrb[0].mxu0
    %v1019 = vadd.f32 %v945, %v1018
    %v1020 = vpop.f32.mrb[0].mxu0
    %v1021 = vadd.f32 %v950, %v1020
    %v1022 = vpop.f32.mrb[0].mxu0
    %v1023 = vadd.f32 %v950, %v1022
    %1024 = vmatprep.mubr.bf16.mxu0 0
    %1025 = vmatmul.mubr.bf16.gmra.mrb[0].mxu0 %v417
    %v1026 = vpop.f32.mrb[0].mxu0
    %v1027 = vadd.f32 %v955, %v1026
    %v1028 = vpop.f32.mrb[0].mxu0
    %v1029 = vadd.f32 %v955, %v1028
    %v1030 = vpop.f32.mrb[0].mxu0
    %v1031 = vadd.f32 %v960, %v1030
    %v1032 = vpop.f32.mrb[0].mxu0
    %v1033 = vadd.f32 %v960, %v1032
    %1034 = vdwg.mxu0
    %v1035 = vmul.f32 %v997, 0.5
    %v1036 = vmul.f32 %v999, 0.5
    %v1037 = vmul.f32 %v1001, 0.5
    %v1038 = vmul.f32 %v1003, 0.5
    %v1039 = vmul.f32 %v1007, 0.5
    %v1040 = vmul.f32 %v1009, 0.5
    %v1041 = vmul.f32 %v1011, 0.5
    %v1042 = vmul.f32 %v1013, 0.5
    %v1043 = vmul.f32 %v1017, 0.5
    %v1044 = vmul.f32 %v1019, 0.5
    %v1045 = vmul.f32 %v1021, 0.5
    %v1046 = vmul.f32 %v1023, 0.5
    %v1047 = vmul.f32 %v1027, 0.5
    %v1048 = vmul.f32 %v1029, 0.5
    %v1049 = vmul.f32 %v1031, 0.5
    %v1050 = vmul.f32 %v1033, 0.5
    %v1051 = vtanh.pop %v1035
    %v1052 = vtanh.pop %v1036
    %v1053 = vtanh.pop %v1037
    %v1054 = vtanh.pop %v1038
    %v1055 = vtanh.pop %v1039
    %v1056 = vtanh.pop %v1040
    %v1057 = vtanh.pop %v1041
    %v1058 = vtanh.pop %v1042
    %v1059 = vtanh.pop %v1043
    %v1060 = vtanh.pop %v1044
    %v1061 = vtanh.pop %v1045
    %v1062 = vtanh.pop %v1046
    %v1063 = vtanh.pop %v1047
    %v1064 = vtanh.pop %v1048
    %v1065 = vtanh.pop %v1049
    %v1066 = vtanh.pop %v1050
    %v1067 = vunpack.c.l.bf16 %v677
    %v1068 = vunpack.c.h.bf16 %v677
    %v1069 = vunpack.c.l.bf16 %v678
    %v1070 = vunpack.c.h.bf16 %v678
    %v1071 = vunpack.c.l.bf16 %v679
    %v1072 = vunpack.c.h.bf16 %v679
    %v1073 = vunpack.c.l.bf16 %v680
    %v1074 = vunpack.c.h.bf16 %v680
    %v1075 = vunpack.c.l.bf16 %v681
    %v1076 = vunpack.c.h.bf16 %v681
    %v1077 = vunpack.c.l.bf16 %v682
    %v1078 = vunpack.c.h.bf16 %v682
    %v1079 = vunpack.c.l.bf16 %v683
    %v1080 = vunpack.c.h.bf16 %v683
    %v1081 = vunpack.c.l.bf16 %v684
    %v1082 = vunpack.c.h.bf16 %v684
    %v1083 = vunpack.c.l.bf16 %v686
    %v1084 = vunpack.c.h.bf16 %v686
    %v1085 = vunpack.c.l.bf16 %v687
    %v1086 = vunpack.c.h.bf16 %v687
    %v1087 = vunpack.c.l.bf16 %v688
    %v1088 = vunpack.c.h.bf16 %v688
    %v1089 = vunpack.c.l.bf16 %v689
    %v1090 = vunpack.c.h.bf16 %v689
    %v1091 = vunpack.c.l.bf16 %v690
    %v1092 = vunpack.c.h.bf16 %v690
    %v1093 = vunpack.c.l.bf16 %v691
    %v1094 = vunpack.c.h.bf16 %v691
    %v1095 = vunpack.c.l.bf16 %v692
    %v1096 = vunpack.c.h.bf16 %v692
    %v1097 = vunpack.c.l.bf16 %v693
    %v1098 = vunpack.c.h.bf16 %v693
    %v1099 = vadd.f32 %v1067, %v1083
    %v1100 = vadd.f32 %v1068, %v1084
    %v1101 = vadd.f32 %v1069, %v1085
    %v1102 = vadd.f32 %v1070, %v1086
    %v1103 = vadd.f32 %v1071, %v1087
    %v1104 = vadd.f32 %v1072, %v1088
    %v1105 = vadd.f32 %v1073, %v1089
    %v1106 = vadd.f32 %v1074, %v1090
    %v1107 = vadd.f32 %v1075, %v1091
    %v1108 = vadd.f32 %v1076, %v1092
    %v1109 = vadd.f32 %v1077, %v1093
    %v1110 = vadd.f32 %v1078, %v1094
    %v1111 = vadd.f32 %v1079, %v1095
    %v1112 = vadd.f32 %v1080, %v1096
    %v1113 = vadd.f32 %v1081, %v1097
    %v1114 = vadd.f32 %v1082, %v1098
    %v1115 = vsub.f32 %v1067, %v1083
    %v1116 = vsub.f32 %v1068, %v1084
    %v1117 = vsub.f32 %v1069, %v1085
    %v1118 = vsub.f32 %v1070, %v1086
    %v1119 = vsub.f32 %v1071, %v1087
    %v1120 = vsub.f32 %v1072, %v1088
    %v1121 = vsub.f32 %v1073, %v1089
    %v1122 = vsub.f32 %v1074, %v1090
    %v1123 = vsub.f32 %v1075, %v1091
    %v1124 = vsub.f32 %v1076, %v1092
    %v1125 = vsub.f32 %v1077, %v1093
    %v1126 = vsub.f32 %v1078, %v1094
    %v1127 = vsub.f32 %v1079, %v1095
    %v1128 = vsub.f32 %v1080, %v1096
    %v1129 = vsub.f32 %v1081, %v1097
    %v1130 = vsub.f32 %v1082, %v1098
    %v1131 = vmul.f32 %v1115, %v1051
    %v1132 = vmul.f32 %v1116, %v1052
    %v1133 = vmul.f32 %v1117, %v1053
    %v1134 = vmul.f32 %v1118, %v1054
    %v1135 = vmul.f32 %v1119, %v1055
    %v1136 = vmul.f32 %v1120, %v1056
    %v1137 = vmul.f32 %v1121, %v1057
    %v1138 = vmul.f32 %v1122, %v1058
    %v1139 = vmul.f32 %v1123, %v1059
    %v1140 = vmul.f32 %v1124, %v1060
    %v1141 = vmul.f32 %v1125, %v1061
    %v1142 = vmul.f32 %v1126, %v1062
    %v1143 = vmul.f32 %v1127, %v1063
    %v1144 = vmul.f32 %v1128, %v1064
    %v1145 = vmul.f32 %v1129, %v1065
    %v1146 = vmul.f32 %v1130, %v1066
    %v1147 = vadd.f32 %v1099, %v1131
    %v1148 = vadd.f32 %v1100, %v1132
    %v1149 = vadd.f32 %v1101, %v1133
    %v1150 = vadd.f32 %v1102, %v1134
    %v1151 = vadd.f32 %v1103, %v1135
    %v1152 = vadd.f32 %v1104, %v1136
    %v1153 = vadd.f32 %v1105, %v1137
    %v1154 = vadd.f32 %v1106, %v1138
    %v1155 = vadd.f32 %v1107, %v1139
    %v1156 = vadd.f32 %v1108, %v1140
    %v1157 = vadd.f32 %v1109, %v1141
    %v1158 = vadd.f32 %v1110, %v1142
    %v1159 = vadd.f32 %v1111, %v1143
    %v1160 = vadd.f32 %v1112, %v1144
    %v1161 = vadd.f32 %v1113, %v1145
    %v1162 = vadd.f32 %v1114, %v1146
    %v1163 = vpack.c.bf16 %v1149, %v1147
    %v1164 = vpack.c.bf16 %v1150, %v1148
    %v1165 = vpack.c.bf16 %v1153, %v1151
    %v1166 = vpack.c.bf16 %v1154, %v1152
    %v1167 = vpack.c.bf16 %v1157, %v1155
    %v1168 = vpack.c.bf16 %v1158, %v1156
    %v1169 = vpack.c.bf16 %v1161, %v1159
    %v1170 = vpack.c.bf16 %v1162, %v1160
    %v1179 = vunpack.c.l.b16 %v1163
    %v1180 = vunpack.c.l.b16 %v1164
    %v1181 = vunpack.c.h.b16 %v1163
    %v1182 = vunpack.c.h.b16 %v1164
    %v1183 = vunpack.c.l.b16 %v1165
    %v1184 = vunpack.c.l.b16 %v1166
    %v1185 = vunpack.c.h.b16 %v1165
    %v1186 = vunpack.c.h.b16 %v1166
    %v1187 = vunpack.c.l.b16 %v1167
    %v1188 = vunpack.c.l.b16 %v1168
    %v1189 = vunpack.c.h.b16 %v1167
    %v1190 = vunpack.c.h.b16 %v1168
    %v1191 = vunpack.c.l.b16 %v1169
    %v1192 = vunpack.c.l.b16 %v1170
    %v1193 = vunpack.c.h.b16 %v1169
    %v1194 = vunpack.c.h.b16 %v1170
    %v1195 = vpack.c.b16 %v1180, %v1179
    %v1196 = vpack.c.b16 %v1182, %v1181
    %v1197 = vpack.c.b16 %v1184, %v1183
    %v1198 = vpack.c.b16 %v1186, %v1185
    %v1199 = vpack.c.b16 %v1188, %v1187
    %v1200 = vpack.c.b16 %v1190, %v1189
    %v1201 = vpack.c.b16 %v1192, %v1191
    %v1202 = vpack.c.b16 %v1194, %v1193
    %s1211 = scalar_lea.vmem [#allocation2], 64
    %1212 = vst [vmem:[%s1211] sm:$0xff] %v1195
    %1213 = vst [vmem:[%s1211 + $0x8] sm:$0xff] %v1196
    %1214 = vst [vmem:[%s1211 + $0x10] sm:$0xff] %v1197
    %1215 = vst [vmem:[%s1211 + $0x18] sm:$0xff] %v1198
    %1216 = vst [vmem:[%s1211 + $0x20] sm:$0xff] %v1199
    %1217 = vst [vmem:[%s1211 + $0x28] sm:$0xff] %v1200
    %1218 = vst [vmem:[%s1211 + $0x30] sm:$0xff] %v1201
    %1219 = vst [vmem:[%s1211 + $0x38] sm:$0xff] %v1202
    // Predicated region
    $region42: #{tpu_custom_call.1} parent=1 // pred_check
      _
    $region43: #{tpu_custom_call.1} parent=1 // pred_check_branch
      %1221 = sbr.rel (0) target = $region45
    $region44: #{tpu_custom_call.1} parent=1 // pred_region
      %s1223 = ssub.s32 2048, 2048
      %1224 = vsyncadd [#allocation3], %s1223
      %s1225 = sshll.u32 [#allocation2], 4
      %s1226 = int_to_ptr.vmem [resolvable:$true] %s1225
      %1231 = dma.vmem_to_hbm [thread:$0]  %s1226, 2048, %s10, [#allocation3], 128, 128, 8
    $region45: #{tpu_custom_call.1} parent=1 // pred_fallthru
      _
    // Predicated region
    $region46: #{tpu_custom_call.1} parent=1 // pred_check
      _
    $region47: #{tpu_custom_call.1} parent=1 // pred_check_branch
      %1233 = sbr.rel (0) target = $region49
    $region48: #{tpu_custom_call.1} parent=1 // pred_region
      %1234 = dma.done [#allocation3], 2048
    $region49: #{tpu_custom_call.1} parent=1 // pred_fallthru
      _
    %1235 = vsyncpa [#allocation3], 1

</llo_original>
